<compile_context>
chip_gen: v7x
topology: tpu7x:2x2x1
jax: 0.10.0
libtpu: 0.0.40
codegen_flags: <defaults>
</compile_context>

<pallas_src>
import functools

import jax
import jax.numpy as jnp
from jax.experimental import pallas as pl
from jax.experimental.pallas import tpu as pltpu


# --------------------------------- kernel -------------------------------------

def _classify_kernel(x_ref, w_ref, o_ref, *, inv_hw):
    """Fused global-average-pool + 1x1 conv (no bias).

    x_ref: (tile_n, tile_c, tile_s)  block of x reshaped to (N, C, H*W)
    w_ref: (tile_c, out_ch)          resident weight slice
    o_ref: (tile_n, out_ch)          VMEM-resident accumulator / output block
    """
    c = pl.program_id(1)
    s = pl.program_id(2)

    # Zero the resident output block at the start of its reduction loops.
    @pl.when(jnp.logical_and(c == 0, s == 0))
    def _():
        o_ref[...] = jnp.zeros_like(o_ref)

    # Partial spatial mean of this block (lane-dense reduction over H*W chunk),
    # immediately folded into the 1x1-conv matmul and accumulated in VMEM.
    pooled = jnp.sum(x_ref[...], axis=-1) * inv_hw            # (tile_n, tile_c)
    o_ref[...] += jnp.dot(pooled, w_ref[...],
                          preferred_element_type=jnp.float32)


# ------------------------------ pallas_call glue -------------------------------

def _pick_tile(dim, base, cap):
    """Largest multiple of `base` that divides `dim`, capped at `cap`; else full dim."""
    if dim % base != 0:
        return dim
    t = base
    while t * 2 <= cap and dim % (t * 2) == 0:
        t *= 2
    return t


def _classify_single(x_ncs, w_cf):
    """x_ncs: (N, C, S=H*W) f32, w_cf: (C, out_ch) f32 -> (N, out_ch) f32."""
    N, C, S = x_ncs.shape
    out_ch = w_cf.shape[1]

    # Tile sizes: keep per-block VMEM bounded (double-buffered by BlockSpec) while
    # respecting the (8, 128) tiling rules (or full-dim blocks for small axes).
    tile_n = _pick_tile(N, 8, 32)
    tile_c = _pick_tile(C, 8, 256)
    tile_s = _pick_tile(S, 128, 128)
    grid = (N // tile_n, C // tile_c, S // tile_s)

    kernel = functools.partial(_classify_kernel, inv_hw=1.0 / float(S))

    return pl.pallas_call(
        kernel,
        out_shape=jax.ShapeDtypeStruct((N, out_ch), jnp.float32),
        grid_spec=pltpu.PrefetchScalarGridSpec(
            num_scalar_prefetch=0,
            grid=grid,
            in_specs=[
                pl.BlockSpec((tile_n, tile_c, tile_s), lambda n, c, s: (n, c, s)),
                pl.BlockSpec((tile_c, out_ch), lambda n, c, s: (c, 0)),
            ],
            out_specs=pl.BlockSpec((tile_n, out_ch), lambda n, c, s: (n, 0)),
        ),
        compiler_params=pltpu.CompilerParams(
            dimension_semantics=("parallel", "arbitrary", "arbitrary")),
    )(x_ncs, w_cf)


# --------------------------------- forward ------------------------------------

def classify_forward(x, weight):
    """Forward of Classify.

    x:      (N, C, H, W) array, or a list of such (channel-concat case).
    weight: (out_ch, sum_Cin, 1, 1) Conv2d weight, bias=False, groups=1.
    returns (N, out_ch).
    """
    xs = list(x) if isinstance(x, (list, tuple)) else [x]
    out_ch = weight.shape[0]
    w = jnp.asarray(weight, jnp.float32).reshape(out_ch, -1).T      # (sum_Cin, out_ch)

    out = None
    c_off = 0
    for xi in xs:
        xi = jnp.asarray(xi, jnp.float32)
        N, C, H, W = xi.shape
        # Contiguous NCHW -> (N, C, H*W) reshape is metadata-only; no transpose needed.
        oi = _classify_single(xi.reshape(N, C, H * W), w[c_off:c_off + C, :])
        out = oi if out is None else out + oi
        c_off += C
    assert c_off == w.shape[0], (c_off, w.shape)
    return out


# ----------------------------------- main --------------------------------------

if __name__ == "__main__":
    key = jax.random.PRNGKey(0)
    kx, kw = jax.random.split(key)

    N, in_ch, H, W = 2, 4, 16, 16
    out_ch = 8

    x = jax.random.normal(kx, (N, in_ch, H, W), dtype=jnp.float32)
    # PyTorch Conv2d(in_ch, out_ch, kernel_size=1, bias=False) weight layout.
    weight = 0.1 * jax.random.normal(kw, (out_ch, in_ch, 1, 1), dtype=jnp.float32)

    out = classify_forward(x, weight)
    out = jax.block_until_ready(out)

    # Pure-JAX reference: flatten(conv1x1(adaptive_avg_pool2d(x, 1))).
    ref = jnp.mean(x, axis=(2, 3)) @ weight.reshape(out_ch, in_ch).T
    assert out.shape == (N, out_ch), out.shape
    assert bool(jnp.all(jnp.isfinite(out)))
    assert bool(jnp.allclose(out, ref, atol=1e-5, rtol=1e-5))

    # List-input path (the torch.cat branch): concat is replaced by weight splitting.
    out_list = classify_forward([x[:, :2], x[:, 2:]], weight)
    out_list = jax.block_until_ready(out_list)
    assert bool(jnp.allclose(out_list, ref, atol=1e-5, rtol=1e-5))

    print("KERNEL_OK")
</pallas_src>

<mosaic_0001>
module attributes {stable_mosaic.version = 11 : i64} {
  func.func @_classify_kernel(%arg0: i32, %arg1: i32, %arg2: i32, %arg3: memref<2x4x128xf32, #tpu.memory_space<vmem>>, %arg4: memref<4x8xf32, #tpu.memory_space<vmem>>, %arg5: memref<2x8xf32, #tpu.memory_space<vmem>>) attributes {dimension_semantics = [#tpu.dimension_semantics<parallel>, #tpu.dimension_semantics<arbitrary>, #tpu.dimension_semantics<arbitrary>], iteration_bounds = array<i64: 1, 1, 2>, scalar_prefetch = 0 : i64, scratch_operands = 0 : i64, tpu.core_type = #tpu.core_type<tc>, window_params = [{transform_indices = @transform_0, window_bounds = array<i64: 2, 4, 128>}, {transform_indices = @transform_1, window_bounds = array<i64: 4, 8>}, {transform_indices = @transform_2, window_bounds = array<i64: 2, 8>}]} {
    %c0_i32 = arith.constant 0 : i32
    %0 = arith.cmpi eq, %arg1, %c0_i32 : i32
    %c0_i32_0 = arith.constant 0 : i32
    %1 = arith.cmpi eq, %arg2, %c0_i32_0 : i32
    %2 = arith.andi %0, %1 : i1
    %3 = arith.extui %2 : i1 to i32
    %c0_i32_1 = arith.constant 0 : i32
    %4 = arith.cmpi ne, %3, %c0_i32_1 : i32
    scf.if %4 {
      %cst_12 = arith.constant 0.000000e+00 : f32
      %14 = vector.broadcast %cst_12 : f32 to vector<2x8xf32>
      %c0_13 = arith.constant 0 : index
      %c0_14 = arith.constant 0 : index
      %15 = vector.load %arg5[%c0_13, %c0_14] : memref<2x8xf32, #tpu.memory_space<vmem>>, vector<2x8xf32>
      tpu.vector_store %arg5[%c0_13, %c0_14], %14 {strides = array<i32>} : memref<2x8xf32, #tpu.memory_space<vmem>>, vector<2x8xf32>,
    } else {
    }
    %c0 = arith.constant 0 : index
    %c0_2 = arith.constant 0 : index
    %c0_3 = arith.constant 0 : index
    %5 = vector.load %arg3[%c0, %c0_2, %c0_3] : memref<2x4x128xf32, #tpu.memory_space<vmem>>, vector<2x4x128xf32>
    %cst = arith.constant dense<0.000000e+00> : vector<2x4xf32>
    %6 = vector.multi_reduction <add>, %5, %cst [2] : vector<2x4x128xf32> to vector<2x4xf32>
    %cst_4 = arith.constant 3.906250e-03 : f32
    %7 = vector.broadcast %cst_4 : f32 to vector<2x4xf32>
    %8 = arith.mulf %6, %7 : vector<2x4xf32>
    %c0_5 = arith.constant 0 : index
    %c0_6 = arith.constant 0 : index
    %9 = vector.load %arg5[%c0_5, %c0_6] : memref<2x8xf32, #tpu.memory_space<vmem>>, vector<2x8xf32>
    %c0_7 = arith.constant 0 : index
    %c0_8 = arith.constant 0 : index
    %10 = vector.load %arg4[%c0_7, %c0_8] : memref<4x8xf32, #tpu.memory_space<vmem>>, vector<4x8xf32>
    %cst_9 = arith.constant dense<0.000000e+00> : vector<2x8xf32>
    %11 = tpu.matmul %8, %10, %cst_9 {dimension_numbers = #tpu.dot_dimension_numbers<[1], [0], [0], [1], [0, 0, 1, 1], [], []>} : vector<2x4xf32>, vector<4x8xf32>, vector<2x8xf32> -> vector<2x8xf32>
    %12 = arith.addf %9, %11 : vector<2x8xf32>
    %c0_10 = arith.constant 0 : index
    %c0_11 = arith.constant 0 : index
    %13 = vector.load %arg5[%c0_10, %c0_11] : memref<2x8xf32, #tpu.memory_space<vmem>>, vector<2x8xf32>
    tpu.vector_store %arg5[%c0_10, %c0_11], %12 {strides = array<i32>} : memref<2x8xf32, #tpu.memory_space<vmem>>, vector<2x8xf32>,
    return
  }
  func.func @transform_0(%arg0: i32, %arg1: i32, %arg2: i32) -> (i32, i32, i32) {
    %c0_i32 = arith.constant 0 : i32
    return %arg0, %arg1, %arg2 : i32, i32, i32
  }
  func.func @transform_1(%arg0: i32, %arg1: i32, %arg2: i32) -> (i32, i32) {
    %c0_i32 = arith.constant 0 : i32
    %c0_i32_0 = arith.constant 0 : i32
    return %arg1, %c0_i32 : i32, i32
  }
  func.func @transform_2(%arg0: i32, %arg1: i32, %arg2: i32) -> (i32, i32) {
    %c0_i32 = arith.constant 0 : i32
    %c0_i32_0 = arith.constant 0 : i32
    return %arg0, %c0_i32 : i32, i32
  }
}

</mosaic_0001>

<llo_original>
// kernel: tpu_custom_call.1
$region0: #{tpu_custom_call.1}
  #allocation0 [shape = 'u32[]', space=smem, size = 0x4, offset = 0x4, fixed_abs, tag = 'smem constant byte address 0x4 - core index']
  #allocation1 [shape = 'u32[144,128]{1,0:T(1,128)}', space=vmem, size = 0x12000, scoped, tag = 'internal scratch']
  %s0 = inlined_call_operand.hbm [shape: f32[2,4,256], index: 0, kind: input, shape index: {}]
  %s1 = inlined_call_operand.hbm [shape: f32[4,8], index: 1, kind: input, shape index: {}]
  %s2 = inlined_call_operand.hbm [shape: f32[2,8], index: 2, kind: output, shape index: {}]
  %s3 = sld [smem:[#allocation0]]
  $region53: #{tpu_custom_call.1} parent=0
    _
  %s5 = ssub.s32 1, %s3
  %s6 = scalar_select 0, %s5, %s3
  $region1: #{tpu_custom_call.1} parent=0
    #allocation2 [shape = 'u8[8192]{0}', space=vmem, size = 0x2000, scoped, tag = 'input window, operand 0']
    #allocation3 [shape = 's32[2]{0}', space=sflag, size = 0x8, scoped, tag = 'scoped memory for tpu_custom_call.1']
    #allocation4 [shape = 's32[2]{0}', space=sflag, size = 0x8, scoped, tag = 'scoped memory for tpu_custom_call.1']
    #allocation5 [shape = 'u8[2048]{0}', space=vmem, size = 0x800, scoped, tag = 'input window, operand 1, single buffered']
    #allocation6 [shape = 's32[1]{0}', space=sflag, size = 0x4, scoped, tag = 'scoped memory for tpu_custom_call.1']
    #allocation7 [shape = 'u8[1024]{0}', space=vmem, size = 0x400, scoped, tag = 'output window, operand 0, single buffered']
    %7 = vsyncpa [#allocation3], 0
    %s8 = scalar_lea.sflag [#allocation3], 1
    %9 = vsyncpa %s8, 0
    %10 = vsyncpa [#allocation6], 0
    %11 = vsyncpa [#allocation4], 0
    loop: start=0, step=1, limit=4
    $region2: #{tpu_custom_call.1} parent=1 // loop_pre_header
      _
    $region3: #{tpu_custom_call.1} parent=1 // loop_header
      %s13 = sphi 0, %s17
      %p14 = scmp.ge.s32.totalorder %s13, 4
      %s20 = sphi 0, %s39
      %s21 = sphi 0, %s35
      %s22 = sphi 0, %s31
      %s23 = sphi 0, %s20
      %s24 = sphi 0, %s21
      %s25 = sphi 0, %s22
      %s26 = sphi 0, %s23
      %s27 = sphi 0, %s24
      %s28 = sphi 0, %s25
      %s46 = sphi 0, %s48
      %s49 = sphi 0, %s46
      %s50 = sphi 0, %s49
      %s66 = sphi 0, %s50
      %s72 = sphi 0, %s74
      %s75 = sphi 0, %s72
      %s76 = sphi 0, %s75
      %s92 = sphi 0, %s76
      %s98 = sphi 0, %s100
      %s101 = sphi 0, %s98
      %s102 = sphi 0, %s101
      %s118 = sphi 0, %s102
    $region4: #{tpu_custom_call.1} parent=1 // loop_header_branch
      %16 = sbr.rel (%p14) target = $region8
    $region5: #{tpu_custom_call.1} parent=1 // loop_body
      %s18 = ssub.s32 %s13, 1
      %s19 = ssub.s32 %s13, 2
      %s29 = sadd.s32 1, %s22
      %p30 = scmp.ge.s32.totalorder %s29, 2
      %s31 = scalar_select %p30, 0, %s29
      %s32 = sadd.s32 1, %s21
      %s33 = scalar_select %p30, %s32, %s21
      %p34 = scmp.ge.s32.totalorder %s33, 1
      %s35 = scalar_select %p34, 0, %s33
      %s36 = sadd.s32 1, %s20
      %s37 = scalar_select %p34, %s36, %s20
      %p38 = scmp.ge.s32.totalorder %s37, 1
      %s39 = scalar_select %p38, 0, %s37
      %s40 = ssub.s32 %s20, %s39
      %s41 = ssub.s32 %s21, %s35
      %s42 = sor.u32 %s40, %s41
      %s43 = ssub.s32 %s22, %s31
      %s44 = sor.u32 %s42, %s43
      %p45 = scmp.eq.s32.totalorder %s44, 0
      %s47 = sadd.s32 %s46, 1
      %s48 = scalar_select %p45, %s46, %s47
      %p51 = pneg %p45
      %p52 = scmp.eq.s32.totalorder %s13, 1
      %p53 = por %p51, %p52
      %p54 = scmp.ne.s32.totalorder %s46, %s49
      %p55 = scmp.eq.s32.totalorder %s13, 0
      %p56 = por %p54, %p55
      %p57 = scmp.ne.s32.totalorder %s46, %s49
      %p58 = scmp.eq.s32.totalorder %s18, 1
      %p59 = por %p57, %p58
      %p60 = scmp.ne.s32.totalorder %s49, %s50
      %p61 = scmp.eq.s32.totalorder %s18, 0
      %p62 = por %p60, %p61
      %p63 = scmp.ne.s32.totalorder %s49, %s50
      %p64 = scmp.eq.s32.totalorder %s19, 1
      %p65 = por %p63, %p64
      %p67 = scmp.ne.s32.totalorder %s50, %s66
      %p68 = scmp.eq.s32.totalorder %s19, 0
      %p69 = por %p67, %p68
      %s70 = ssub.s32 %s21, %s35
      %p71 = scmp.eq.s32.totalorder %s70, 0
      %s73 = sadd.s32 %s72, 1
      %s74 = scalar_select %p71, %s72, %s73
      %p77 = pneg %p71
      %p78 = scmp.eq.s32.totalorder %s13, 1
      %p79 = por %p77, %p78
      %p80 = scmp.ne.s32.totalorder %s72, %s75
      %p81 = scmp.eq.s32.totalorder %s13, 0
      %p82 = por %p80, %p81
      %p83 = scmp.ne.s32.totalorder %s72, %s75
      %p84 = scmp.eq.s32.totalorder %s18, 1
      %p85 = por %p83, %p84
      %p86 = scmp.ne.s32.totalorder %s75, %s76
      %p87 = scmp.eq.s32.totalorder %s18, 0
      %p88 = por %p86, %p87
      %p89 = scmp.ne.s32.totalorder %s75, %s76
      %p90 = scmp.eq.s32.totalorder %s19, 1
      %p91 = por %p89, %p90
      %p93 = scmp.ne.s32.totalorder %s76, %s92
      %p94 = scmp.eq.s32.totalorder %s19, 0
      %p95 = por %p93, %p94
      %s96 = ssub.s32 %s20, %s39
      %p97 = scmp.eq.s32.totalorder %s96, 0
      %s99 = sadd.s32 %s98, 1
      %s100 = scalar_select %p97, %s98, %s99
      %p103 = pneg %p97
      %p104 = scmp.eq.s32.totalorder %s13, 1
      %p105 = por %p103, %p104
      %p106 = scmp.ne.s32.totalorder %s98, %s101
      %p107 = scmp.eq.s32.totalorder %s13, 0
      %p108 = por %p106, %p107
      %p109 = scmp.ne.s32.totalorder %s98, %s101
      %p110 = scmp.eq.s32.totalorder %s18, 1
      %p111 = por %p109, %p110
      %p112 = scmp.ne.s32.totalorder %s101, %s102
      %p113 = scmp.eq.s32.totalorder %s18, 0
      %p114 = por %p112, %p113
      %p115 = scmp.ne.s32.totalorder %s101, %s102
      %p116 = scmp.eq.s32.totalorder %s19, 1
      %p117 = por %p115, %p116
      %p119 = scmp.ne.s32.totalorder %s102, %s118
      %p120 = scmp.eq.s32.totalorder %s19, 0
      %p121 = por %p119, %p120
      %p122 = scmp.le.s32.totalorder 1, %s13
      %p123 = scmp.lt.s32.totalorder %s13, 3
      %p124 = pnand %p122, %p123
      %p125 = pneg %p124
      // Predicated region
      $region9: #{tpu_custom_call.1} parent=5 // pred_check
        _
      $region10: #{tpu_custom_call.1} parent=5 // pred_check_branch
        %127 = sbr.rel (%p124) target = $region12
      $region11: #{tpu_custom_call.1} parent=5 // pred_region
        %s128 = ssub.s32 %s13, 1
        // Predicated region
        $region13: #{tpu_custom_call.1} parent=11 // pred_check
          %p129 = pneg %p88
        $region14: #{tpu_custom_call.1} parent=11 // pred_check_branch
          %131 = sbr.rel (%p129) target = $region16
        $region15: #{tpu_custom_call.1} parent=11 // pred_region
          %s133 = ssub.s32 64, 64
          %134 = vsyncadd [#allocation6], %s133
          %s135 = smul.addr %s24, 64
          %s136 = scalar_lea.hbm %s1, %s135
          %s138 = sshll.u32 [#allocation5], 4
          %s139 = int_to_ptr.vmem [resolvable:$true] %s138
          %141 = dma.hbm_to_vmem [thread:$0]  %s136, 64, %s139, [#allocation6]
        $region16: #{tpu_custom_call.1} parent=11 // pred_fallthru
          _
      $region12: #{tpu_custom_call.1} parent=5 // pred_fallthru
        _
      %p142 = scmp.lt.s32.totalorder %s13, 2
      // Predicated region
      $region17: #{tpu_custom_call.1} parent=5 // pred_check
        %p143 = pneg %p142
      $region18: #{tpu_custom_call.1} parent=5 // pred_check_branch
        %145 = sbr.rel (%p143) target = $region20
      $region19: #{tpu_custom_call.1} parent=5 // pred_region
        // Predicated region
        $region21: #{tpu_custom_call.1} parent=19 // pred_check
          %p146 = pneg %p56
        $region22: #{tpu_custom_call.1} parent=19 // pred_check_branch
          %148 = sbr.rel (%p146) target = $region24
        $region23: #{tpu_custom_call.1} parent=19 // pred_region
          %s149 = sand.u32 %s46, 1
          %s150 = scalar_lea.sflag [#allocation3], %s149
          %s151 = sand.u32 %s46, 1
          %s152 = smul.addr %s151, 8
          %s153 = scalar_lea.vmem [#allocation2], %s152
          %s154 = smul.u32 2, %s20
          %s156 = ssub.s32 128, 128
          %157 = vsyncadd %s150, %s156
          %s158 = smul.addr %s21, 2
          %s159 = sadd.s32 %s22, %s158
          %s160 = smul.addr %s154, 2
          %s161 = sadd.s32 %s159, %s160
          %s162 = smul.addr %s161, 64
          %s163 = scalar_lea.hbm %s0, %s162
          %s164 = sshll.u32 %s153, 4
          %s165 = int_to_ptr.vmem [resolvable:$true] %s164
          %170 = dma.hbm_to_vmem [thread:$0]  %s163, 128, %s165, %s150, 128, 64, 4
        $region24: #{tpu_custom_call.1} parent=19 // pred_fallthru
          _
      $region20: #{tpu_custom_call.1} parent=5 // pred_fallthru
        _
      %p171 = scmp.le.s32.totalorder 1, %s13
      %p172 = scmp.lt.s32.totalorder %s13, 3
      %p173 = pnand %p171, %p172
      %p174 = pneg %p173
      // Predicated region
      $region25: #{tpu_custom_call.1} parent=5 // pred_check
        _
      $region26: #{tpu_custom_call.1} parent=5 // pred_check_branch
        %176 = sbr.rel (%p173) target = $region28
      $region27: #{tpu_custom_call.1} parent=5 // pred_region
        %s177 = ssub.s32 %s13, 1
        %s178 = sand.u32 %s49, 1
        %s179 = scalar_lea.sflag [#allocation3], %s178
        %s180 = sand.u32 %s49, 1
        %s181 = smul.addr %s180, 8
        %s182 = scalar_lea.vmem [#allocation2], %s181
        // Predicated region
        $region29: #{tpu_custom_call.1} parent=27 // pred_check
          %p183 = pneg %p62
        $region30: #{tpu_custom_call.1} parent=27 // pred_check_branch
          %185 = sbr.rel (%p183) target = $region32
        $region31: #{tpu_custom_call.1} parent=27 // pred_region
          %186 = dma.done %s179, 128
        $region32: #{tpu_custom_call.1} parent=27 // pred_fallthru
          _
        // Predicated region
        $region33: #{tpu_custom_call.1} parent=27 // pred_check
          %p187 = pneg %p88
        $region34: #{tpu_custom_call.1} parent=27 // pred_check_branch
          %189 = sbr.rel (%p187) target = $region36
        $region35: #{tpu_custom_call.1} parent=27 // pred_region
          %190 = dma.done [#allocation6], 64
        $region36: #{tpu_custom_call.1} parent=27 // pred_fallthru
          _
        %s191 = sand.u32 %s49, 1
        %s192 = scalar_lea.sflag [#allocation3], %s191
        %s193 = sand.u32 %s49, 1
        %s194 = smul.addr %s193, 8
        %s195 = scalar_lea.vmem [#allocation2], %s194
        %p196 = pneg %p62
        %p197 = pneg %p59
        %p198 = pneg %p88
        %p199 = pneg %p85
        %p200 = pneg %p114
        %p201 = pneg %p111
        %s202 = smul.u32 2, %s23
        %p203 = scmp.eq.s32.totalorder %s24, 0
        %p204 = scmp.eq.s32.totalorder %s25, 0
        %p205 = pnand %p203, %p204
        %p206 = pneg %p205
        // Predicated region
        $region37: #{tpu_custom_call.1} parent=27 // pred_check
          _
        $region38: #{tpu_custom_call.1} parent=27 // pred_check_branch
          %208 = sbr.rel (%p205) target = $region40
        $region39: #{tpu_custom_call.1} parent=27 // pred_region
          %vm209 = vcmask 58368
          %210 = vst.msk [vmem:[#allocation7] sm:$0x3] %vm209, 0.0
        $region40: #{tpu_custom_call.1} parent=27 // pred_fallthru
          _
        %v211 = vld [vmem:[%s182] sm:$0xf]
        %v212 = vld [vmem:[%s182 + $0x4] sm:$0xf]
        %vm213 = vcmask 1043456
        %v214 = vsel %vm213, %v211, 0.0
        %215 = vadd.xlane.f32.xlu0 %v214
        %v216 = vpop.xlane.xlu0 %215
        %v217 = vsel %vm213, %v212, 0.0
        %218 = vadd.xlane.f32.xlu0 %v217
        %v219 = vpop.xlane.xlu0 %218
        %v220 = vmul.f32 %v216, 0.00390625
        %v221 = vmul.f32 %v219, 0.00390625
        %v222 = vld [vmem:[#allocation7] sm:$0x3]
        %v223 = vld [vmem:[#allocation5] sm:$0xf]
        %v226 = vlaneseq
        %v227 = vand.u32 %v226, 127
        %v228 = vlaneseq
        %v229 = vshrl.u32 %v228, 7
        %v230 = vsub.s32 %v227, %v229
        %v231 = vrot.slane %v220, %v230
        %v232 = vlaneseq
        %v233 = vshrl.u32 %v232, 7
        %v234 = vsub.s32 %v227, %v233
        %v235 = vrot.slane %v221, %v234
        %vm236 = vcmask 1041409
        %v237 = vsel %vm236, %v235, %v231
        %vm238 = vcmask 31744
        %v239 = vsel %vm238, %v237, 0
        %v242 = vsel %vm213, %v223, 0
        %244 = vmatprep.subr.mxu0 0.0
        %245 = vmatpush1.msra.mxu0 %v242
        %246 = vmatprep.subr.mxu0 0.0
        %247 = vmatpush1.msra.mxu0 0.0
        %248 = vmatprep.subr.mxu0 0.0
        %249 = vmatpush1.msra.mxu0 0.0
        %250 = vmatprep.subr.mxu0 0.0
        %251 = vmatpush1.msra.mxu0 0.0
        %252 = vmatprep.subr.mxu0 0.0
        %253 = vmatpush1.msra.mxu0 0.0
        %254 = vmatprep.subr.mxu0 0.0
        %255 = vmatpush1.msra.mxu0 0.0
        %256 = vmatprep.subr.mxu0 0.0
        %257 = vmatpush1.msra.mxu0 0.0
        %258 = vmatprep.subr.mxu0 0.0
        %259 = vmatpush1.msra.mxu0 0.0
        %260 = vmatprep.subr.mxu0 0.0
        %261 = vmatpush1.msra.mxu0 0.0
        %262 = vmatprep.subr.mxu0 0.0
        %263 = vmatpush1.msra.mxu0 0.0
        %264 = vmatprep.subr.mxu0 0.0
        %265 = vmatpush1.msra.mxu0 0.0
        %266 = vmatprep.subr.mxu0 0.0
        %267 = vmatpush1.msra.mxu0 0.0
        %268 = vmatprep.subr.mxu0 0.0
        %269 = vmatpush1.msra.mxu0 0.0
        %270 = vmatprep.subr.mxu0 0.0
        %271 = vmatpush1.msra.mxu0 0.0
        %272 = vmatprep.subr.mxu0 0.0
        %273 = vmatpush1.msra.mxu0 0.0
        %274 = vmatprep.subr.mxu0 0.0
        %275 = vmatpush1.msra.mxu0 0.0
        %276 = vmatprep.subr.mxu0 0.0
        %277 = vmatpush1.msra.mxu0 0.0
        %278 = vmatprep.subr.mxu0 0.0
        %279 = vmatpush1.msra.mxu0 0.0
        %280 = vmatprep.subr.mxu0 0.0
        %281 = vmatpush1.msra.mxu0 0.0
        %282 = vmatprep.subr.mxu0 0.0
        %283 = vmatpush1.msra.mxu0 0.0
        %284 = vmatprep.subr.mxu0 0.0
        %285 = vmatpush1.msra.mxu0 0.0
        %286 = vmatprep.subr.mxu0 0.0
        %287 = vmatpush1.msra.mxu0 0.0
        %288 = vmatprep.subr.mxu0 0.0
        %289 = vmatpush1.msra.mxu0 0.0
        %290 = vmatprep.subr.mxu0 0.0
        %291 = vmatpush1.msra.mxu0 0.0
        %292 = vmatprep.subr.mxu0 0.0
        %293 = vmatpush1.msra.mxu0 0.0
        %294 = vmatprep.subr.mxu0 0.0
        %295 = vmatpush1.msra.mxu0 0.0
        %296 = vmatprep.subr.mxu0 0.0
        %297 = vmatpush1.msra.mxu0 0.0
        %298 = vmatprep.subr.mxu0 0.0
        %299 = vmatpush1.msra.mxu0 0.0
        %300 = vmatprep.subr.mxu0 0.0
        %301 = vmatpush1.msra.mxu0 0.0
        %302 = vmatprep.subr.mxu0 0.0
        %303 = vmatpush1.msra.mxu0 0.0
        %304 = vmatprep.subr.mxu0 0.0
        %305 = vmatpush1.msra.mxu0 0.0
        %306 = vmatprep.subr.mxu0 0.0
        %307 = vmatpush1.msra.mxu0 0.0
        %308 = vmatprep.mubr.f32.mxu0 0.0
        %309 = vmatmul.mubr.f32.gmra.mrb[0].mxu0 %v239
        %v310 = vpop.f32.mrb[0].mxu0
        %v311 = vadd.f32 0.0, %v310
        %v312 = vpop.f32.mrb[0].mxu0
        %313 = vdwg.mxu0
        %v314 = vadd.f32 %v222, %v311
        %vm315 = vcmask 58368
        %316 = vst.msk [vmem:[#allocation7] sm:$0x3] %vm315, %v314
        // Predicated region
        $region41: #{tpu_custom_call.1} parent=27 // pred_check
          %p317 = pneg %p111
        $region42: #{tpu_custom_call.1} parent=27 // pred_check_branch
          %319 = sbr.rel (%p317) target = $region44
        $region43: #{tpu_custom_call.1} parent=27 // pred_region
          %s321 = ssub.s32 32, 32
          %322 = vsyncadd [#allocation4], %s321
          %s323 = smul.addr %s23, 32
          %s324 = scalar_lea.hbm %s2, %s323
          %s326 = sshll.u32 [#allocation7], 4
          %s327 = int_to_ptr.vmem [resolvable:$true] %s326
          %329 = dma.vmem_to_hbm [thread:$0]  %s327, 32, %s324, [#allocation4]
        $region44: #{tpu_custom_call.1} parent=27 // pred_fallthru
          _
        // Predicated region
        $region45: #{tpu_custom_call.1} parent=27 // pred_check
          %p330 = pneg %p111
        $region46: #{tpu_custom_call.1} parent=27 // pred_check_branch
          %332 = sbr.rel (%p330) target = $region48
        $region47: #{tpu_custom_call.1} parent=27 // pred_region
          %333 = dma.done [#allocation4], 32
        $region48: #{tpu_custom_call.1} parent=27 // pred_fallthru
          _
      $region28: #{tpu_custom_call.1} parent=5 // pred_fallthru
        _
      %p334 = scmp.le.s32.totalorder 2, %s13
      // Predicated region
      $region49: #{tpu_custom_call.1} parent=5 // pred_check
        %p335 = pneg %p334
      $region50: #{tpu_custom_call.1} parent=5 // pred_check_branch
        %337 = sbr.rel (%p335) target = $region52
      $region51: #{tpu_custom_call.1} parent=5 // pred_region
        %s338 = ssub.s32 %s13, 2
      $region52: #{tpu_custom_call.1} parent=5 // pred_fallthru
        _
    $region6: #{tpu_custom_call.1} parent=1 // loop_footer
      %s17 = sadd.s32 1, %s13
    $region7: #{tpu_custom_call.1} parent=1 // loop_footer_branch
      %12 = sbr.rel target = $region3
    $region8: #{tpu_custom_call.1} parent=1 // loop_exit
      _
    %339 = vsyncpa [#allocation3], 1
    %s340 = scalar_lea.sflag [#allocation3], 1
    %341 = vsyncpa %s340, 1
    %342 = vsyncpa [#allocation6], 1
    %343 = vsyncpa [#allocation4], 1
    %s344 = scalar_lea.sflag [#allocation4], 1
    %345 = vsyncpa %s344, 1

</llo_original>
